<compile_context>
chip_gen: v7x
topology: tpu7x:2x2x1
jax: 0.10.0
libtpu: 0.0.40
codegen_flags: <defaults>
</compile_context>

<pallas_src>
import functools

import jax
import jax.numpy as jnp
from jax import lax
from jax.experimental import pallas as pl
from jax.experimental.pallas import tpu as pltpu

# ---------------- small shapes implied by the module --------------------------
B = 2            # batch
S = 8            # sequence length
H = 32           # hidden_size
VOCAB = 50       # vocab_size
MAXPOS = 16      # max_position_size (>= S)
TYPEVOCAB = 5    # type_vocab_size
EPS = 1e-12      # LayerNorm eps


def embeddings_kernel(ids_ref, table_ref, out_ref,
                      *, hidden, vocab, max_pos, gamma_row, num_rows,
                      pad_rows, pad_h):
    # ids_ref:   (N, 3) int32   [:,0]=word id, [:,1]=token-type id, [:,2]=pos id
    # table_ref: (pad_rows, pad_h) packed [word; position; token_type; gamma;
    #            beta; zero-pad] table, columns zero-padded from H to pad_h
    # out_ref:   (N, pad_h) float32
    word = ids_ref[:, 0:1]                                            # (N, 1)
    tt = ids_ref[:, 1:2]                                              # (N, 1)
    pos = ids_ref[:, 2:3]                                             # (N, 1)

    # Combined one-hot: three hits per row -> the single MXU matmul sums the
    # three embedding rows (word + position + token_type) in one pass.
    col = lax.broadcasted_iota(jnp.int32, (num_rows, pad_rows), 1)
    onehot = ((col == word) |
              (col == vocab + pos) |
              (col == vocab + max_pos + tt)).astype(jnp.float32)      # (N, pad_rows)

    emb = jnp.dot(onehot, table_ref[...],
                  preferred_element_type=jnp.float32)                 # (N, pad_h)
    # emb[:, hidden:] == 0 because the padded table columns are zero.

    gamma = table_ref[gamma_row:gamma_row + 1, :]                     # (1, pad_h)
    beta = table_ref[gamma_row + 1:gamma_row + 2, :]                  # (1, pad_h)

    inv_h = 1.0 / hidden
    # Mean over the true H lanes only (padded lanes contribute exactly 0).
    u = jnp.sum(emb, axis=-1, keepdims=True) * inv_h                  # (N, 1)
    lane = lax.broadcasted_iota(jnp.int32, (num_rows, pad_h), 1)
    centered = jnp.where(lane < hidden, emb - u, 0.0)                 # mask padding
    var = jnp.sum(centered * centered, axis=-1, keepdims=True) * inv_h
    xn = centered * lax.rsqrt(var + EPS)                              # EUP rsqrt

    # Padded lanes: xn == 0 and gamma == beta == 0 there, so output lanes
    # [hidden:pad_h) are exactly 0 and the store stays full-width (lane-dense).
    # TODO(synk): dropout is eval-mode identity (no RNG in inference forward).
    out_ref[...] = (gamma * xn + beta).astype(out_ref.dtype)


def embeddings_forward(input_ids, input_mask, word_table, pos_table, tt_table,
                       gamma, beta):
    b, s = input_ids.shape
    v, h = word_table.shape
    p = pos_table.shape[0]
    t = tt_table.shape[0]
    n = b * s

    # ---- host-side packing (one-time layout work, not per-call compute) -----
    pad_h = max(128, ((h + 127) // 128) * 128)       # lane-dense hidden width
    total = v + p + t
    gamma_row = total                                # gamma / beta rows in table
    rows_needed = total + 2
    pad_rows = ((max(rows_needed, 128) + 127) // 128) * 128

    # Packed table: [word; position; token_type; gamma; beta; zero rows],
    # columns zero-padded from h to pad_h.  Valid ids never hit the
    # gamma/beta rows (out-of-range ids would -- document, don't check).
    packed_table = jnp.concatenate(
        [word_table, pos_table, tt_table, gamma[None, :], beta[None, :]],
        axis=0)
    packed_table = jnp.pad(packed_table,
                           ((0, pad_rows - rows_needed), (0, pad_h - h)))

    pos_ids = jnp.broadcast_to(jnp.arange(s, dtype=jnp.int32)[None, :],
                               (b, s)).reshape(n)
    ids3 = jnp.stack([input_ids.reshape(n).astype(jnp.int32),
                      input_mask.reshape(n).astype(jnp.int32),
                      pos_ids], axis=1)              # (N, 3)

    kernel = functools.partial(
        embeddings_kernel,
        hidden=h, vocab=v, max_pos=p, gamma_row=gamma_row,
        num_rows=n, pad_rows=pad_rows, pad_h=pad_h)

    out = pl.pallas_call(
        kernel,
        out_shape=jax.ShapeDtypeStruct((n, pad_h), jnp.float32),
        # No grid: nothing to pipeline, whole arrays resident in VMEM.
        in_specs=[
            pl.BlockSpec(memory_space=pltpu.MemorySpace.VMEM),   # packed ids
            pl.BlockSpec(memory_space=pltpu.MemorySpace.VMEM),   # packed table
        ],
        out_specs=pl.BlockSpec(memory_space=pltpu.MemorySpace.VMEM),
    )(ids3, packed_table)

    return out[:, :h].reshape(b, s, h)


def embeddings_reference(input_ids, input_mask, word_table, pos_table, tt_table,
                         gamma, beta):
    """Pure-JAX reference mirroring the PyTorch forward."""
    b, s = input_ids.shape
    words = word_table[input_ids]                       # (B, S, H)
    tts = tt_table[input_mask]                          # (B, S, H)
    pos = pos_table[jnp.arange(s)]                      # (S, H)
    emb = words + tts + pos[None, :, :]
    u = jnp.mean(emb, -1, keepdims=True)
    var = jnp.mean((emb - u) ** 2, -1, keepdims=True)
    return gamma * ((emb - u) / jnp.sqrt(var + EPS)) + beta


if __name__ == "__main__":
    key = jax.random.PRNGKey(0)
    k_ids, k_tt, k_w, k_p, k_t, k_g, k_b = jax.random.split(key, 7)

    input_ids = jax.random.randint(k_ids, (B, S), 0, VOCAB, dtype=jnp.int32)
    # input_mask is used as token-type ids in the module; values in [0, TYPEVOCAB)
    input_mask = jax.random.randint(k_tt, (B, S), 0, 2, dtype=jnp.int32)

    word_table = jax.random.normal(k_w, (VOCAB, H), jnp.float32)
    pos_table = jax.random.normal(k_p, (MAXPOS, H), jnp.float32)
    tt_table = jax.random.normal(k_t, (TYPEVOCAB, H), jnp.float32)
    gamma = 1.0 + 0.1 * jax.random.normal(k_g, (H,), jnp.float32)
    beta = 0.1 * jax.random.normal(k_b, (H,), jnp.float32)

    out = embeddings_forward(input_ids, input_mask, word_table, pos_table,
                             tt_table, gamma, beta)
    out = jax.block_until_ready(out)

    ref = embeddings_reference(input_ids, input_mask, word_table, pos_table,
                               tt_table, gamma, beta)

    assert out.shape == (B, S, H)
    assert jnp.allclose(out, ref, atol=1e-4, rtol=1e-4)

    print("KERNEL_OK")
</pallas_src>

<mosaic_0001>
module attributes {stable_mosaic.version = 11 : i64} {
  func.func @embeddings_kernel(%arg0: memref<16x3xi32, #tpu.memory_space<vmem>>, %arg1: memref<128x128xf32, #tpu.memory_space<vmem>>, %arg2: memref<16x128xf32, #tpu.memory_space<vmem>>) attributes {dimension_semantics = [], scalar_prefetch = 0 : i64, scratch_operands = 0 : i64, tpu.core_type = #tpu.core_type<tc>} {
    %c0 = arith.constant 0 : index
    %c0_0 = arith.constant 0 : index
    %0 = vector.load %arg0[%c0, %c0_0] : memref<16x3xi32, #tpu.memory_space<vmem>>, vector<16x1xi32>
    %c0_1 = arith.constant 0 : index
    %c1 = arith.constant 1 : index
    %1 = vector.load %arg0[%c0_1, %c1] : memref<16x3xi32, #tpu.memory_space<vmem>>, vector<16x1xi32>
    %c0_2 = arith.constant 0 : index
    %c2 = arith.constant 2 : index
    %2 = vector.load %arg0[%c0_2, %c2] : memref<16x3xi32, #tpu.memory_space<vmem>>, vector<16x1xi32>
    %3 = tpu.iota {dimensions = array<i32: 1>} : vector<16x128xi32>
    %4 = vector.broadcast %0 : vector<16x1xi32> to vector<16x128xi32>
    %5 = arith.cmpi eq, %3, %4 : vector<16x128xi32>
    %c50_i32 = arith.constant 50 : i32
    %6 = vector.broadcast %c50_i32 : i32 to vector<16x1xi32>
    %7 = arith.addi %6, %2 : vector<16x1xi32>
    %8 = vector.broadcast %7 : vector<16x1xi32> to vector<16x128xi32>
    %9 = arith.cmpi eq, %3, %8 : vector<16x128xi32>
    %10 = arith.ori %5, %9 : vector<16x128xi1>
    %c66_i32 = arith.constant 66 : i32
    %11 = vector.broadcast %c66_i32 : i32 to vector<16x1xi32>
    %12 = arith.addi %11, %1 : vector<16x1xi32>
    %13 = vector.broadcast %12 : vector<16x1xi32> to vector<16x128xi32>
    %14 = arith.cmpi eq, %3, %13 : vector<16x128xi32>
    %15 = arith.ori %10, %14 : vector<16x128xi1>
    %16 = arith.extui %15 : vector<16x128xi1> to vector<16x128xi32>
    %17 = arith.sitofp %16 : vector<16x128xi32> to vector<16x128xf32>
    %c0_3 = arith.constant 0 : index
    %c0_4 = arith.constant 0 : index
    %18 = vector.load %arg1[%c0_3, %c0_4] : memref<128x128xf32, #tpu.memory_space<vmem>>, vector<128x128xf32>
    %cst = arith.constant dense<0.000000e+00> : vector<16x128xf32>
    %19 = tpu.matmul %17, %18, %cst {dimension_numbers = #tpu.dot_dimension_numbers<[1], [0], [0], [1], [0, 0, 1, 1], [], []>} : vector<16x128xf32>, vector<128x128xf32>, vector<16x128xf32> -> vector<16x128xf32>
    %c71 = arith.constant 71 : index
    %c0_5 = arith.constant 0 : index
    %20 = vector.load %arg1[%c71, %c0_5] : memref<128x128xf32, #tpu.memory_space<vmem>>, vector<1x128xf32>
    %c72 = arith.constant 72 : index
    %c0_6 = arith.constant 0 : index
    %21 = vector.load %arg1[%c72, %c0_6] : memref<128x128xf32, #tpu.memory_space<vmem>>, vector<1x128xf32>
    %cst_7 = arith.constant dense<0.000000e+00> : vector<16xf32>
    %22 = vector.multi_reduction <add>, %19, %cst_7 [1] : vector<16x128xf32> to vector<16xf32>
    %23 = vector.shape_cast %22 : vector<16xf32> to vector<16x1xf32>
    %cst_8 = arith.constant 3.125000e-02 : f32
    %24 = vector.broadcast %cst_8 : f32 to vector<16x1xf32>
    %25 = arith.mulf %23, %24 : vector<16x1xf32>
    %26 = tpu.iota {dimensions = array<i32: 1>} : vector<16x128xi32>
    %c32_i32 = arith.constant 32 : i32
    %27 = vector.broadcast %c32_i32 : i32 to vector<16x128xi32>
    %28 = arith.cmpi slt, %26, %27 : vector<16x128xi32>
    %29 = vector.broadcast %25 : vector<16x1xf32> to vector<16x128xf32>
    %30 = arith.subf %19, %29 : vector<16x128xf32>
    %cst_9 = arith.constant 0.000000e+00 : f32
    %31 = vector.broadcast %cst_9 : f32 to vector<16x128xf32>
    %32 = arith.select %28, %30, %31 : vector<16x128xi1>, vector<16x128xf32>
    %33 = arith.mulf %32, %32 : vector<16x128xf32>
    %cst_10 = arith.constant dense<0.000000e+00> : vector<16xf32>
    %34 = vector.multi_reduction <add>, %33, %cst_10 [1] : vector<16x128xf32> to vector<16xf32>
    %35 = vector.shape_cast %34 : vector<16xf32> to vector<16x1xf32>
    %cst_11 = arith.constant 3.125000e-02 : f32
    %36 = vector.broadcast %cst_11 : f32 to vector<16x1xf32>
    %37 = arith.mulf %35, %36 : vector<16x1xf32>
    %cst_12 = arith.constant 9.99999996E-13 : f32
    %38 = vector.broadcast %cst_12 : f32 to vector<16x1xf32>
    %39 = arith.addf %37, %38 : vector<16x1xf32>
    %40 = math.rsqrt %39 : vector<16x1xf32>
    %41 = vector.broadcast %40 : vector<16x1xf32> to vector<16x128xf32>
    %42 = arith.mulf %32, %41 : vector<16x128xf32>
    %43 = vector.broadcast %20 : vector<1x128xf32> to vector<16x128xf32>
    %44 = arith.mulf %43, %42 : vector<16x128xf32>
    %45 = vector.broadcast %21 : vector<1x128xf32> to vector<16x128xf32>
    %46 = arith.addf %44, %45 : vector<16x128xf32>
    %c0_13 = arith.constant 0 : index
    %c0_14 = arith.constant 0 : index
    %47 = vector.load %arg2[%c0_13, %c0_14] : memref<16x128xf32, #tpu.memory_space<vmem>>, vector<16x128xf32>
    tpu.vector_store %arg2[%c0_13, %c0_14], %46 {strides = array<i32>} : memref<16x128xf32, #tpu.memory_space<vmem>>, vector<16x128xf32>,
    return
  }
}

</mosaic_0001>

<llo_original>
// kernel: tpu_custom_call.1
$region0: #{tpu_custom_call.1}
  #allocation0 [shape = 'u32[]', space=smem, size = 0x4, offset = 0x4, fixed_abs, tag = 'smem constant byte address 0x4 - core index']
  #allocation1 [shape = 'u32[144,128]{1,0:T(1,128)}', space=vmem, size = 0x12000, scoped, tag = 'internal scratch']
  %s0 = inlined_call_operand.vmem [shape: s32[16,3], index: 0, kind: input, shape index: {}]
  %s1 = inlined_call_operand.hbm [shape: f32[128,128], index: 1, kind: input, shape index: {}]
  %s2 = inlined_call_operand.hbm [shape: f32[16,128], index: 2, kind: output, shape index: {}]
  %s3 = sld [smem:[#allocation0]]
  $region22: #{tpu_custom_call.1} parent=0
    _
  %s5 = ssub.s32 1, %s3
  %s6 = scalar_select 0, %s5, %s3
  $region1: #{tpu_custom_call.1} parent=0
    #allocation2 [shape = 'u8[65536]{0}', space=vmem, size = 0x10000, scoped, tag = 'input window, operand 1, single buffered']
    #allocation3 [shape = 's32[1]{0}', space=sflag, size = 0x4, scoped, tag = 'scoped memory for tpu_custom_call.1']
    #allocation4 [shape = 's32[1]{0}', space=sflag, size = 0x4, scoped, tag = 'scoped memory for tpu_custom_call.1']
    #allocation5 [shape = 'u8[8192]{0}', space=vmem, size = 0x2000, scoped, tag = 'output window, operand 0, single buffered']
    %7 = vsyncpa [#allocation3], 0
    %8 = vsyncpa [#allocation4], 0
    // Predicated region
    $region2: #{tpu_custom_call.1} parent=1 // pred_check
      _
    $region3: #{tpu_custom_call.1} parent=1 // pred_check_branch
      %10 = sbr.rel (0) target = $region5
    $region4: #{tpu_custom_call.1} parent=1 // pred_region
      _
    $region5: #{tpu_custom_call.1} parent=1 // pred_fallthru
      _
    // Predicated region
    $region6: #{tpu_custom_call.1} parent=1 // pred_check
      _
    $region7: #{tpu_custom_call.1} parent=1 // pred_check_branch
      %12 = sbr.rel (0) target = $region9
    $region8: #{tpu_custom_call.1} parent=1 // pred_region
      %s14 = ssub.s32 2048, 2048
      %15 = vsyncadd [#allocation3], %s14
      %s16 = sshll.u32 [#allocation2], 4
      %s17 = int_to_ptr.vmem [resolvable:$true] %s16
      %22 = dma.hbm_to_vmem [thread:$0]  %s1, 2048, %s17, [#allocation3], 128, 128, 8
    $region9: #{tpu_custom_call.1} parent=1 // pred_fallthru
      _
    // Predicated region
    $region10: #{tpu_custom_call.1} parent=1 // pred_check
      _
    $region11: #{tpu_custom_call.1} parent=1 // pred_check_branch
      %24 = sbr.rel (0) target = $region13
    $region12: #{tpu_custom_call.1} parent=1 // pred_region
      %25 = dma.done [#allocation3], 2048
    $region13: #{tpu_custom_call.1} parent=1 // pred_fallthru
      _
    %v26 = vld [vmem:[%s0] sm:$0xff]
    %v27 = vld [vmem:[%s0 + $0x8] sm:$0xff]
    %v28 = vlaneseq
    %v29 = vand.u32 %v28, 127
    %30 = vset.pattern.permute.xlu0 0
    %31 = vperm.xlu0 %30, %v26
    %v32 = vpop.permute.xlu0 %31
    %33 = vset.pattern.permute.xlu0 0
    %34 = vperm.xlu0 %33, %v27
    %v35 = vpop.permute.xlu0 %34
    %vm36 = vcmp.eq.s32.totalorder %v29, %v32
    %vm37 = vcmp.eq.s32.totalorder %v29, %v35
    %v38 = vadd.s32 %v26, 50
    %v39 = vadd.s32 %v27, 50
    %40 = vset.pattern.permute.xlu0 2
    %41 = vperm.xlu0 %40, %v38
    %v42 = vpop.permute.xlu0 %41
    %43 = vset.pattern.permute.xlu0 2
    %44 = vperm.xlu0 %43, %v39
    %v45 = vpop.permute.xlu0 %44
    %vm46 = vcmp.eq.s32.totalorder %v29, %v42
    %vm47 = vcmp.eq.s32.totalorder %v29, %v45
    %vm48 = vmor %vm36, %vm46
    %vm49 = vmor %vm37, %vm47
    %v50 = vadd.s32 %v26, 66
    %v51 = vadd.s32 %v27, 66
    %52 = vset.pattern.permute.xlu0 1
    %53 = vperm.xlu0 %52, %v50
    %v54 = vpop.permute.xlu0 %53
    %55 = vset.pattern.permute.xlu0 1
    %56 = vperm.xlu0 %55, %v51
    %v57 = vpop.permute.xlu0 %56
    %vm58 = vcmp.eq.s32.totalorder %v29, %v54
    %vm59 = vcmp.eq.s32.totalorder %v29, %v57
    %vm60 = vmor %vm48, %vm58
    %vm61 = vmor %vm49, %vm59
    %v62 = vsel %vm60, 1, 0
    %v63 = vsel %vm61, 1, 0
    %v64 = vcvt.s32.f32 %v62
    %v65 = vcvt.s32.f32 %v63
    %v66 = vld [vmem:[#allocation2] sm:$0xff]
    %v67 = vld [vmem:[#allocation2 + $0x8] sm:$0xff]
    %v68 = vld [vmem:[#allocation2 + $0x10] sm:$0xff]
    %v69 = vld [vmem:[#allocation2 + $0x18] sm:$0xff]
    %v70 = vld [vmem:[#allocation2 + $0x20] sm:$0xff]
    %v71 = vld [vmem:[#allocation2 + $0x28] sm:$0xff]
    %v72 = vld [vmem:[#allocation2 + $0x30] sm:$0xff]
    %v73 = vld [vmem:[#allocation2 + $0x38] sm:$0xff]
    %v74 = vld [vmem:[#allocation2 + $0x40] sm:$0xff]
    %v75 = vld [vmem:[#allocation2 + $0x48] sm:$0xff]
    %v76 = vld [vmem:[#allocation2 + $0x50] sm:$0xff]
    %v77 = vld [vmem:[#allocation2 + $0x58] sm:$0xff]
    %v78 = vld [vmem:[#allocation2 + $0x60] sm:$0xff]
    %v79 = vld [vmem:[#allocation2 + $0x68] sm:$0xff]
    %v80 = vld [vmem:[#allocation2 + $0x70] sm:$0xff]
    %v81 = vld [vmem:[#allocation2 + $0x78] sm:$0xff]
    %82 = vmatprep.subr.mxu0 0.0
    %83 = vmatpush1.msra.mxu0 %v66
    %84 = vmatprep.subr.mxu0 0.0
    %85 = vmatpush1.msra.mxu0 %v67
    %86 = vmatprep.subr.mxu0 0.0
    %87 = vmatpush1.msra.mxu0 %v68
    %88 = vmatprep.subr.mxu0 0.0
    %89 = vmatpush1.msra.mxu0 %v69
    %90 = vmatprep.subr.mxu0 0.0
    %91 = vmatpush1.msra.mxu0 %v70
    %92 = vmatprep.subr.mxu0 0.0
    %93 = vmatpush1.msra.mxu0 %v71
    %94 = vmatprep.subr.mxu0 0.0
    %95 = vmatpush1.msra.mxu0 %v72
    %96 = vmatprep.subr.mxu0 0.0
    %97 = vmatpush1.msra.mxu0 %v73
    %98 = vmatprep.subr.mxu0 0.0
    %99 = vmatpush1.msra.mxu0 %v74
    %100 = vmatprep.subr.mxu0 0.0
    %101 = vmatpush1.msra.mxu0 %v75
    %102 = vmatprep.subr.mxu0 0.0
    %103 = vmatpush1.msra.mxu0 %v76
    %104 = vmatprep.subr.mxu0 0.0
    %105 = vmatpush1.msra.mxu0 %v77
    %106 = vmatprep.subr.mxu0 0.0
    %107 = vmatpush1.msra.mxu0 %v78
    %108 = vmatprep.subr.mxu0 0.0
    %109 = vmatpush1.msra.mxu0 %v79
    %110 = vmatprep.subr.mxu0 0.0
    %111 = vmatpush1.msra.mxu0 %v80
    %112 = vmatprep.subr.mxu0 0.0
    %113 = vmatpush1.msra.mxu0 %v81
    %114 = vmatprep.subr.mxu0 0.0
    %115 = vmatpush1.msra.mxu0 0.0
    %116 = vmatprep.subr.mxu0 0.0
    %117 = vmatpush1.msra.mxu0 0.0
    %118 = vmatprep.subr.mxu0 0.0
    %119 = vmatpush1.msra.mxu0 0.0
    %120 = vmatprep.subr.mxu0 0.0
    %121 = vmatpush1.msra.mxu0 0.0
    %122 = vmatprep.subr.mxu0 0.0
    %123 = vmatpush1.msra.mxu0 0.0
    %124 = vmatprep.subr.mxu0 0.0
    %125 = vmatpush1.msra.mxu0 0.0
    %126 = vmatprep.subr.mxu0 0.0
    %127 = vmatpush1.msra.mxu0 0.0
    %128 = vmatprep.subr.mxu0 0.0
    %129 = vmatpush1.msra.mxu0 0.0
    %130 = vmatprep.subr.mxu0 0.0
    %131 = vmatpush1.msra.mxu0 0.0
    %132 = vmatprep.subr.mxu0 0.0
    %133 = vmatpush1.msra.mxu0 0.0
    %134 = vmatprep.subr.mxu0 0.0
    %135 = vmatpush1.msra.mxu0 0.0
    %136 = vmatprep.subr.mxu0 0.0
    %137 = vmatpush1.msra.mxu0 0.0
    %138 = vmatprep.subr.mxu0 0.0
    %139 = vmatpush1.msra.mxu0 0.0
    %140 = vmatprep.subr.mxu0 0.0
    %141 = vmatpush1.msra.mxu0 0.0
    %142 = vmatprep.subr.mxu0 0.0
    %143 = vmatpush1.msra.mxu0 0.0
    %144 = vmatprep.subr.mxu0 0.0
    %145 = vmatpush1.msra.mxu0 0.0
    %146 = vmatprep.mubr.f32.mxu0 0.0
    %147 = vmatmul.mubr.f32.gmra.mrb[0].mxu0 %v64
    %v148 = vpop.f32.mrb[0].mxu0
    %v149 = vadd.f32 0.0, %v148
    %v150 = vpop.f32.mrb[0].mxu0
    %151 = vmatprep.mubr.f32.mxu0 0.0
    %152 = vmatmul.mubr.f32.gmra.mrb[0].mxu0 %v65
    %v153 = vpop.f32.mrb[0].mxu0
    %v154 = vadd.f32 0.0, %v153
    %v155 = vpop.f32.mrb[0].mxu0
    %156 = vdwg.mxu0
    %v157 = vld [vmem:[#allocation2 + $0x47] sm:$0x1]
    %v158 = vld [vmem:[#allocation2 + $0x48] sm:$0x1]
    %159 = vadd.xlane.f32.xlu0 %v149
    %v160 = vpop.xlane.xlu0 %159
    %161 = vadd.xlane.f32.xlu0 %v154
    %v162 = vpop.xlane.xlu0 %161
    %v163 = vmul.f32 %v160, 0.03125
    %v164 = vmul.f32 %v162, 0.03125
    %vm165 = vcmp.lt.s32.totalorder %v29, 32
    %v166 = vsub.f32 %v149, %v163
    %v167 = vsub.f32 %v154, %v164
    %v168 = vsel %vm165, %v166, 0.0
    %v169 = vsel %vm165, %v167, 0.0
    %v170 = vmul.f32 %v168, %v168
    %v171 = vmul.f32 %v169, %v169
    %172 = vadd.xlane.f32.xlu0 %v170
    %v173 = vpop.xlane.xlu0 %172
    %174 = vadd.xlane.f32.xlu0 %v171
    %v175 = vpop.xlane.xlu0 %174
    %v176 = vmul.f32 %v173, 0.03125
    %v177 = vmul.f32 %v175, 0.03125
    %v178 = vadd.f32 %v176, 1e-12
    %v179 = vadd.f32 %v177, 1e-12
    %v180 = vrsqrt.pop %v178
    %v181 = vrsqrt.pop %v179
    %v182 = vmul.f32 %v168, %v180
    %v183 = vmul.f32 %v169, %v181
    %v184 = vlaneseq
    %v185 = vshrl.u32 %v184, 7
    %v186 = vsub.s32 0, %v185
    %v187 = vrot.slane %v157, %v186
    %v188 = vmul.f32 %v187, %v182
    %v189 = vmul.f32 %v187, %v183
    %v190 = vlaneseq
    %v191 = vshrl.u32 %v190, 7
    %v192 = vsub.s32 0, %v191
    %v193 = vrot.slane %v158, %v192
    %v194 = vadd.f32 %v188, %v193
    %v195 = vadd.f32 %v189, %v193
    %196 = vst [vmem:[#allocation5] sm:$0xff] %v194
    %197 = vst [vmem:[#allocation5 + $0x8] sm:$0xff] %v195
    // Predicated region
    $region14: #{tpu_custom_call.1} parent=1 // pred_check
      _
    $region15: #{tpu_custom_call.1} parent=1 // pred_check_branch
      %199 = sbr.rel (0) target = $region17
    $region16: #{tpu_custom_call.1} parent=1 // pred_region
      %s201 = ssub.s32 256, 256
      %202 = vsyncadd [#allocation4], %s201
      %s203 = sshll.u32 [#allocation5], 4
      %s204 = int_to_ptr.vmem [resolvable:$true] %s203
      %209 = dma.vmem_to_hbm [thread:$0]  %s204, 256, %s2, [#allocation4], 128, 128, 8
    $region17: #{tpu_custom_call.1} parent=1 // pred_fallthru
      _
    // Predicated region
    $region18: #{tpu_custom_call.1} parent=1 // pred_check
      _
    $region19: #{tpu_custom_call.1} parent=1 // pred_check_branch
      %211 = sbr.rel (0) target = $region21
    $region20: #{tpu_custom_call.1} parent=1 // pred_region
      %212 = dma.done [#allocation4], 256
    $region21: #{tpu_custom_call.1} parent=1 // pred_fallthru
      _
    %213 = vsyncpa [#allocation3], 1
    %214 = vsyncpa [#allocation4], 1

</llo_original>
